<compile_context>
chip_gen: v6e
topology: v6e:2x2x1
jax: 0.10.0
libtpu: 0.0.40
codegen_flags: <defaults>
</compile_context>

<pallas_src>
import jax
import jax.numpy as jnp
import numpy as np
from jax.experimental import pallas as pl
from jax.experimental.pallas import tpu as pltpu

# ----- config (consistent with the module at small shapes) -----
BATCH = 2
SEQ = 8
HIDDEN = 32


def roberta_pooler_kernel(x_ref, w_ref, b_ref, out_ref):
    # x_ref: (B, S, H)  w_ref: (H, H) stored (in, out)  b_ref: (1, H)  out_ref: (B, H)
    x = x_ref[...]                      # (B, S, H) — tiny, loaded once
    first_token = x[:, 0, :]            # (B, H): sublane slice, no cross-lane shuffle

    pooled = jnp.dot(first_token, w_ref[...],
                     preferred_element_type=jnp.float32) + b_ref[...]
    out_ref[...] = jnp.tanh(pooled).astype(out_ref.dtype)


def roberta_pooler(hidden_states, w, b):
    """hidden_states: (B, S, H) float32; w: (H, H) as (in, out); b: (1, H)."""
    B, S, H = hidden_states.shape
    return pl.pallas_call(
        roberta_pooler_kernel,
        out_shape=jax.ShapeDtypeStruct((B, H), hidden_states.dtype),
        # Single invocation (grid=()): full-array blocks, everything resident in VMEM.
        in_specs=[
            pl.BlockSpec((B, S, H), lambda: (0, 0, 0)),
            pl.BlockSpec((H, H), lambda: (0, 0)),
            pl.BlockSpec((1, H), lambda: (0, 0)),
        ],
        out_specs=pl.BlockSpec((B, H), lambda: (0, 0)),
    )(hidden_states, w, b)


def reference(hidden_states, w, b):
    first_token = hidden_states[:, 0]
    return jnp.tanh(first_token @ w + b)


if __name__ == "__main__":
    key = jax.random.PRNGKey(0)
    k_x, k_w, k_b = jax.random.split(key, 3)

    x = jax.random.normal(k_x, (BATCH, SEQ, HIDDEN), jnp.float32)
    w = 0.05 * jax.random.normal(k_w, (HIDDEN, HIDDEN), jnp.float32)   # (in, out)
    b = 0.05 * jax.random.normal(k_b, (1, HIDDEN), jnp.float32)

    out = jax.block_until_ready(roberta_pooler(x, w, b))
    ref = jax.block_until_ready(reference(x, w, b))

    np.testing.assert_allclose(np.asarray(out), np.asarray(ref), rtol=1e-5, atol=1e-5)
    print("KERNEL_OK")
</pallas_src>

<mosaic_0001>
module attributes {stable_mosaic.version = 11 : i64} {
  func.func @roberta_pooler_kernel(%arg0: memref<2x8x32xf32, #tpu.memory_space<vmem>>, %arg1: memref<32x32xf32, #tpu.memory_space<vmem>>, %arg2: memref<1x32xf32, #tpu.memory_space<vmem>>, %arg3: memref<2x32xf32, #tpu.memory_space<vmem>>) attributes {dimension_semantics = [], scalar_prefetch = 0 : i64, scratch_operands = 0 : i64, tpu.core_type = #tpu.core_type<tc>} {
    %c0 = arith.constant 0 : index
    %c0_0 = arith.constant 0 : index
    %c0_1 = arith.constant 0 : index
    %0 = vector.load %arg0[%c0, %c0_0, %c0_1] : memref<2x8x32xf32, #tpu.memory_space<vmem>>, vector<2x8x32xf32>
    %1 = vector.extract_strided_slice %0 {offsets = [0, 0, 0], sizes = [2, 1, 32], strides = [1, 1, 1]} : vector<2x8x32xf32> to vector<2x1x32xf32>
    %2 = vector.shape_cast %1 : vector<2x1x32xf32> to vector<2x32xf32>
    %c0_2 = arith.constant 0 : index
    %c0_3 = arith.constant 0 : index
    %3 = vector.load %arg1[%c0_2, %c0_3] : memref<32x32xf32, #tpu.memory_space<vmem>>, vector<32x32xf32>
    %cst = arith.constant dense<0.000000e+00> : vector<2x32xf32>
    %4 = tpu.matmul %2, %3, %cst {dimension_numbers = #tpu.dot_dimension_numbers<[1], [0], [0], [1], [0, 0, 1, 1], [], []>} : vector<2x32xf32>, vector<32x32xf32>, vector<2x32xf32> -> vector<2x32xf32>
    %c0_4 = arith.constant 0 : index
    %c0_5 = arith.constant 0 : index
    %5 = vector.load %arg2[%c0_4, %c0_5] : memref<1x32xf32, #tpu.memory_space<vmem>>, vector<1x32xf32>
    %6 = vector.broadcast %5 : vector<1x32xf32> to vector<2x32xf32>
    %7 = arith.addf %4, %6 : vector<2x32xf32>
    %8 = math.tanh %7 : vector<2x32xf32>
    %c0_6 = arith.constant 0 : index
    %c0_7 = arith.constant 0 : index
    %9 = vector.load %arg3[%c0_6, %c0_7] : memref<2x32xf32, #tpu.memory_space<vmem>>, vector<2x32xf32>
    tpu.vector_store %arg3[%c0_6, %c0_7], %8 {strides = array<i32>} : memref<2x32xf32, #tpu.memory_space<vmem>>, vector<2x32xf32>,
    return
  }
}

</mosaic_0001>

<llo_original>
// kernel: tpu_custom_call.1
$region0: #{tpu_custom_call.1}
  #allocation0 [shape = 'u32[]', space=smem, size = 0x4, offset = 0x4, fixed_abs, tag = 'smem constant byte address 0x4 - core index']
  #allocation1 [shape = 'u32[144,128]{1,0:T(1,128)}', space=vmem, size = 0x12000, scoped, tag = 'internal scratch']
  %s0 = inlined_call_operand.hbm [shape: f32[2,8,32], index: 0, kind: input, shape index: {}]
  %s1 = inlined_call_operand.hbm [shape: f32[32,32], index: 1, kind: input, shape index: {}]
  %s2 = inlined_call_operand.vmem [shape: f32[1,32], index: 2, kind: input, shape index: {}]
  %s3 = inlined_call_operand.hbm [shape: f32[2,32], index: 3, kind: output, shape index: {}]
  %s4 = sld [smem:[#allocation0]]
  $region30: #{tpu_custom_call.1} parent=0
    _
  %s6 = ssub.s32 1, %s4
  %s7 = scalar_select 0, %s6, %s4
  $region1: #{tpu_custom_call.1} parent=0
    #allocation2 [shape = 'u8[8192]{0}', space=vmem, size = 0x2000, scoped, tag = 'input window, operand 0, single buffered']
    #allocation3 [shape = 's32[1]{0}', space=sflag, size = 0x4, scoped, tag = 'scoped memory for tpu_custom_call.1']
    #allocation4 [shape = 's32[1]{0}', space=sflag, size = 0x4, scoped, tag = 'scoped memory for tpu_custom_call.1']
    #allocation5 [shape = 'u8[16384]{0}', space=vmem, size = 0x4000, scoped, tag = 'input window, operand 1, single buffered']
    #allocation6 [shape = 's32[1]{0}', space=sflag, size = 0x4, scoped, tag = 'scoped memory for tpu_custom_call.1']
    #allocation7 [shape = 'u8[1024]{0}', space=vmem, size = 0x400, scoped, tag = 'output window, operand 0, single buffered']
    %8 = vsyncpa [#allocation3], 0
    %9 = vsyncpa [#allocation6], 0
    %10 = vsyncpa [#allocation4], 0
    // Predicated region
    $region2: #{tpu_custom_call.1} parent=1 // pred_check
      _
    $region3: #{tpu_custom_call.1} parent=1 // pred_check_branch
      %12 = sbr.rel (0) target = $region5
    $region4: #{tpu_custom_call.1} parent=1 // pred_region
      %s14 = ssub.s32 256, 256
      %15 = vsyncadd [#allocation3], %s14
      %s16 = sshll.u32 [#allocation2], 4
      %s17 = int_to_ptr.vmem [resolvable:$true] %s16
      %22 = dma.hbm_to_vmem [thread:$0]  %s0, 256, %s17, [#allocation3], 128, 128, 8
    $region5: #{tpu_custom_call.1} parent=1 // pred_fallthru
      _
    // Predicated region
    $region6: #{tpu_custom_call.1} parent=1 // pred_check
      _
    $region7: #{tpu_custom_call.1} parent=1 // pred_check_branch
      %24 = sbr.rel (0) target = $region9
    $region8: #{tpu_custom_call.1} parent=1 // pred_region
      %s26 = ssub.s32 512, 512
      %27 = vsyncadd [#allocation6], %s26
      %s28 = sshll.u32 [#allocation5], 4
      %s29 = int_to_ptr.vmem [resolvable:$true] %s28
      %34 = dma.hbm_to_vmem [thread:$0]  %s1, 512, %s29, [#allocation6], 128, 128, 8
    $region9: #{tpu_custom_call.1} parent=1 // pred_fallthru
      _
    // Predicated region
    $region10: #{tpu_custom_call.1} parent=1 // pred_check
      _
    $region11: #{tpu_custom_call.1} parent=1 // pred_check_branch
      %36 = sbr.rel (0) target = $region13
    $region12: #{tpu_custom_call.1} parent=1 // pred_region
      _
    $region13: #{tpu_custom_call.1} parent=1 // pred_fallthru
      _
    // Predicated region
    $region14: #{tpu_custom_call.1} parent=1 // pred_check
      _
    $region15: #{tpu_custom_call.1} parent=1 // pred_check_branch
      %38 = sbr.rel (0) target = $region17
    $region16: #{tpu_custom_call.1} parent=1 // pred_region
      %39 = dma.done [#allocation3], 256
    $region17: #{tpu_custom_call.1} parent=1 // pred_fallthru
      _
    // Predicated region
    $region18: #{tpu_custom_call.1} parent=1 // pred_check
      _
    $region19: #{tpu_custom_call.1} parent=1 // pred_check_branch
      %41 = sbr.rel (0) target = $region21
    $region20: #{tpu_custom_call.1} parent=1 // pred_region
      %42 = dma.done [#allocation6], 512
    $region21: #{tpu_custom_call.1} parent=1 // pred_fallthru
      _
    %v43 = vld [vmem:[#allocation2] sm:$0xff]
    %v44 = vld [vmem:[#allocation2 + $0x8] sm:$0xff]
    %v45 = vld [vmem:[#allocation5] sm:$0xff]
    %v46 = vld [vmem:[#allocation5 + $0x8] sm:$0xff]
    %v47 = vld [vmem:[#allocation5 + $0x10] sm:$0xff]
    %v48 = vld [vmem:[#allocation5 + $0x18] sm:$0xff]
    %v49 = vld [vmem:[%s2] sm:$0x1]
    %v51 = vlaneseq
    %v52 = vshrl.u32 %v51, 7
    %v53 = vsub.s32 0, %v52
    %v54 = vrot.slane %v49, %v53
    %v58 = vrot.slane %v44, 7
    %vm59 = vcmask 1041409
    %v60 = vsel %vm59, %v58, %v43
    %vm61 = vcmask 261120
    %v62 = vsel %vm61, %v60, 0
    %64 = vmatprep.subr.mxu0 0.0
    %65 = vmatpush1.msra.mxu0 0.0
    %66 = vmatprep.subr.mxu0 0.0
    %67 = vmatpush1.msra.mxu0 0.0
    %68 = vmatprep.subr.mxu0 0.0
    %69 = vmatpush1.msra.mxu0 0.0
    %70 = vmatprep.subr.mxu0 0.0
    %71 = vmatpush1.msra.mxu0 0.0
    %72 = vmatprep.subr.mxu0 0.0
    %73 = vmatpush1.msra.mxu0 0.0
    %74 = vmatprep.subr.mxu0 0.0
    %75 = vmatpush1.msra.mxu0 0.0
    %76 = vmatprep.subr.mxu0 0.0
    %77 = vmatpush1.msra.mxu0 0.0
    %78 = vmatprep.subr.mxu0 0.0
    %79 = vmatpush1.msra.mxu0 0.0
    %80 = vmatprep.subr.mxu0 0.0
    %81 = vmatpush1.msra.mxu0 0.0
    %82 = vmatprep.subr.mxu0 0.0
    %83 = vmatpush1.msra.mxu0 0.0
    %84 = vmatprep.subr.mxu0 0.0
    %85 = vmatpush1.msra.mxu0 0.0
    %86 = vmatprep.subr.mxu0 0.0
    %87 = vmatpush1.msra.mxu0 0.0
    %88 = vmatprep.subr.mxu0 0.0
    %89 = vmatpush1.msra.mxu0 %v48
    %90 = vmatprep.subr.mxu0 0.0
    %91 = vmatpush1.msra.mxu0 %v47
    %92 = vmatprep.subr.mxu0 0.0
    %93 = vmatpush1.msra.mxu0 %v46
    %94 = vmatprep.subr.mxu0 0.0
    %95 = vmatpush1.msra.mxu0 %v45
    %96 = vmatprep.subr.mxu0 0.0
    %97 = vmatpush2.msra.mxu0 0.0
    %98 = vmatprep.subr.mxu0 0.0
    %99 = vmatpush2.msra.mxu0 0.0
    %100 = vmatprep.subr.mxu0 0.0
    %101 = vmatpush2.msra.mxu0 0.0
    %102 = vmatprep.subr.mxu0 0.0
    %103 = vmatpush2.msra.mxu0 0.0
    %104 = vmatprep.subr.mxu0 0.0
    %105 = vmatpush2.msra.mxu0 0.0
    %106 = vmatprep.subr.mxu0 0.0
    %107 = vmatpush2.msra.mxu0 0.0
    %108 = vmatprep.subr.mxu0 0.0
    %109 = vmatpush2.msra.mxu0 0.0
    %110 = vmatprep.subr.mxu0 0.0
    %111 = vmatpush2.msra.mxu0 0.0
    %112 = vmatprep.subr.mxu0 0.0
    %113 = vmatpush2.msra.mxu0 0.0
    %114 = vmatprep.subr.mxu0 0.0
    %115 = vmatpush2.msra.mxu0 0.0
    %116 = vmatprep.subr.mxu0 0.0
    %117 = vmatpush2.msra.mxu0 0.0
    %118 = vmatprep.subr.mxu0 0.0
    %119 = vmatpush2.msra.mxu0 0.0
    %120 = vmatprep.subr.mxu0 0.0
    %121 = vmatpush2.msra.mxu0 0.0
    %122 = vmatprep.subr.mxu0 0.0
    %123 = vmatpush2.msra.mxu0 0.0
    %124 = vmatprep.subr.mxu0 0.0
    %125 = vmatpush2.msra.mxu0 0.0
    %126 = vmatprep.subr.mxu0 0.0
    %127 = vmatpush2.msra.mxu0 0.0
    %128 = vmatprep.mubr.f32.mxu0 0.0
    %129 = vmatmul.mubr.f32.gmra.mxu0 %v62
    %v130 = vpop.f32.mrf.mxu0
    %v131 = vadd.f32 %v54, %v130
    %v132 = vpop.f32.mrf.mxu0
    %133 = vdwg.mxu0
    %v134 = vtanh.pop %v131
    %vm135 = vcmask 254976
    %136 = vst.msk [vmem:[#allocation7] sm:$0x3] %vm135, %v134
    // Predicated region
    $region22: #{tpu_custom_call.1} parent=1 // pred_check
      _
    $region23: #{tpu_custom_call.1} parent=1 // pred_check_branch
      %138 = sbr.rel (0) target = $region25
    $region24: #{tpu_custom_call.1} parent=1 // pred_region
      %s140 = ssub.s32 32, 32
      %141 = vsyncadd [#allocation4], %s140
      %s143 = sshll.u32 [#allocation7], 4
      %s144 = int_to_ptr.vmem [resolvable:$true] %s143
      %146 = dma.vmem_to_hbm [thread:$0]  %s144, 32, %s3, [#allocation4]
    $region25: #{tpu_custom_call.1} parent=1 // pred_fallthru
      _
    // Predicated region
    $region26: #{tpu_custom_call.1} parent=1 // pred_check
      _
    $region27: #{tpu_custom_call.1} parent=1 // pred_check_branch
      %148 = sbr.rel (0) target = $region29
    $region28: #{tpu_custom_call.1} parent=1 // pred_region
      %149 = dma.done [#allocation4], 32
    $region29: #{tpu_custom_call.1} parent=1 // pred_fallthru
      _
    %150 = vsyncpa [#allocation3], 1
    %151 = vsyncpa [#allocation6], 1
    %152 = vsyncpa [#allocation4], 1

</llo_original>
